<compile_context>
chip_gen: v5e
topology: v5e:2x2
jax: 0.10.0
libtpu: 0.0.40
codegen_flags: <defaults>
</compile_context>

<pallas_src>
import functools

import jax
import jax.numpy as jnp
from jax import lax
from jax.experimental import pallas as pl
from jax.experimental.pallas import tpu as pltpu

EPS = 1e-5  # torch.nn.LayerNorm default


def _round_up(n, m):
    return ((n + m - 1) // m) * m


def _layernorm_scale_residual(y, x_f32, g1):
    # LayerNorm over last dim, elementwise_affine=False (biased var, eps=1e-5),
    # then *(gamma+1) and residual add.  All stats in f32 on the VPU.
    mean = jnp.mean(y, axis=-1, keepdims=True)
    centered = y - mean
    var = jnp.mean(centered * centered, axis=-1, keepdims=True)
    y_norm = centered * lax.rsqrt(var + EPS)
    return y_norm * g1 + x_f32


# ----------------------------------------------------------------------------
# Kernels
# ----------------------------------------------------------------------------
def _rn_kernel_resident(x_ref, w_ref, b_ref, g1_ref, o_ref):
    # x_ref : (tm, D) input rows (also the residual)
    # w_ref : (D, D)  linear weight (pre-transposed), resident, kept bf16
    # b_ref : (1, D)  linear bias, f32
    # g1_ref: (1, D)  precomputed (gamma + 1), f32
    x = x_ref[...]
    # Cast only the (tm, D) activation tile to the weight dtype; MXU accumulates
    # in f32 so the LayerNorm statistics stay accurate.
    y = jnp.dot(x.astype(w_ref.dtype), w_ref[...],
                preferred_element_type=jnp.float32) + b_ref[...]
    o_ref[...] = _layernorm_scale_residual(
        y, x.astype(jnp.float32), g1_ref[...]).astype(o_ref.dtype)


def _rn_kernel_ksplit(x_ref, w_ref, b_ref, g1_ref, o_ref, acc_ref, *, tk):
    # K-reduction variant for large D (weight streamed in (tk, D) slabs).
    # x_ref : (tm, D)  full rows, resident across the k loop (block idx (i, 0))
    # w_ref : (tk, D)  streamed weight slab for this k step
    # acc_ref: (tm, D) f32 VMEM accumulator scratch
    k = pl.program_id(1)

    @pl.when(k == 0)
    def _():
        acc_ref[...] = jnp.zeros_like(acc_ref)

    off = pl.multiple_of(k * tk, tk)
    xk = x_ref[:, pl.ds(off, tk)]
    acc_ref[...] += jnp.dot(xk.astype(w_ref.dtype), w_ref[...],
                            preferred_element_type=jnp.float32)

    @pl.when(k == pl.num_programs(1) - 1)
    def _():
        y = acc_ref[...] + b_ref[...]
        o_ref[...] = _layernorm_scale_residual(
            y, x_ref[...].astype(jnp.float32), g1_ref[...]).astype(o_ref.dtype)


# ----------------------------------------------------------------------------
# Tiling / VMEM heuristics
# ----------------------------------------------------------------------------
def _vmem_capacity_bytes():
    # Per-TensorCore VMEM: 128 MiB on v5e/v6e, 64 MiB on v7x.
    try:
        return int(pltpu.get_tpu_info().vmem_capacity_bytes)
    except Exception:
        return 64 << 20  # conservative default (v7x per-TC)


def _pick_tm(rows, D):
    # Target ~2 MiB of f32 rows per x tile so the ~0.35 us per-grid-step
    # overhead is amortized (measured: >=1 MiB tiles hit ~85% of HBM roofline),
    # clamped to [256, 2048] rows and to a multiple of 8.
    target = (2 << 20) // (4 * D)
    target = max(256, min(2048, target))
    target = max(8, (target // 8) * 8)
    if rows <= target:
        return max(8, _round_up(rows, 8))
    # Minimize row-padding waste over {target, target/2, target/4};
    # prefer the larger tile on ties.
    cands = []
    t = target
    for _ in range(3):
        if t >= 256:
            cands.append(max(8, (t // 8) * 8))
        t //= 2
    if not cands:
        cands = [target]
    return min(cands, key=lambda c: (_round_up(rows, c) - rows, -c))


def _maybe_single_buffered_spec(shape, index_map, single_buffer):
    # Pallas double-buffers every input by default; for a grid-invariant
    # resident weight that costs 2x its size in VMEM for no benefit.  Request
    # single buffering only when the weight is large enough to matter (so the
    # small-shape paths never depend on pipeline_mode support).
    if single_buffer:
        try:
            return pl.BlockSpec(shape, index_map, pipeline_mode=pl.Buffered(1))
        except Exception:
            pass  # pipeline_mode not supported on this jax version; fall back
    return pl.BlockSpec(shape, index_map)


# ----------------------------------------------------------------------------
# Wrapper
# ----------------------------------------------------------------------------
@functools.partial(jax.jit, static_argnames=("tm", "force_ksplit", "out_dtype"))
def residual_norm(x, w, b, gamma, *, tm=None, force_ksplit=False, out_dtype=None):
    """x: (B, S, D); w: (D, D) pre-transposed Linear weight (bf16 ok); b, gamma: (D,).

    out_dtype: optional output dtype (e.g. jnp.bfloat16 to halve writeback bytes
    in the HBM-bound small-D regime); defaults to x.dtype.
    """
    B, S, D = x.shape
    rows = B * S
    out_dtype = x.dtype if out_dtype is None else out_dtype

    x_item = jnp.dtype(x.dtype).itemsize
    o_item = jnp.dtype(out_dtype).itemsize
    w_item = jnp.dtype(w.dtype).itemsize
    w_bytes = D * D * w_item

    cap = _vmem_capacity_bytes()
    budget = max(cap - (8 << 20), 24 << 20)  # leave headroom below physical VMEM

    # --- row tile ------------------------------------------------------------
    if tm is None:
        tm_eff = _pick_tm(rows, D)
    else:
        tm_eff = max(8, _round_up(min(tm, _round_up(rows, 8)), 8))

    single_buffer_w = w_bytes >= (2 << 20)

    def resident_bytes(t):
        wbuf = w_bytes if single_buffer_w else 2 * w_bytes
        return (wbuf
                + 2 * t * D * x_item          # double-buffered x tiles
                + 2 * t * D * o_item          # double-buffered out tiles
                + 4 * t * D * 4               # f32 temporaries (y, centered, x_f32, out)
                + 4 * 2 * D * 4               # bias + (gamma+1)
                + (2 << 20))                  # headroom

    # Shrink tm before giving up on the resident-weight path.
    while tm_eff > 256 and resident_bytes(tm_eff) > budget:
        tm_eff = max(256, ((tm_eff // 2) // 8) * 8)

    use_ksplit = force_ksplit or resident_bytes(tm_eff) > budget

    tk = None
    if use_ksplit:
        assert D % 128 == 0, "K-split path requires D to be a multiple of 128"
        tk = next(t for t in (512, 256, 128) if D % t == 0)

        def ksplit_bytes(t):
            return (2 * tk * D * w_item       # streamed weight slabs (double-buffered)
                    + 2 * t * D * x_item
                    + 2 * t * D * o_item
                    + t * D * 4               # f32 accumulator scratch
                    + 4 * t * D * 4           # f32 temporaries at finalize
                    + 4 * 2 * D * 4
                    + (2 << 20))

        while tm_eff > 256 and ksplit_bytes(tm_eff) > budget:
            tm_eff = max(256, ((tm_eff // 2) // 8) * 8)
        vmem_need = ksplit_bytes(tm_eff)
    else:
        vmem_need = resident_bytes(tm_eff)

    vmem_bytes = int(min(max(vmem_need, 32 << 20), budget))

    # --- pad rows to the tile ------------------------------------------------
    rows_pad = _round_up(rows, tm_eff)
    x2d = x.reshape(rows, D)
    if rows_pad != rows:
        # Padded rows produce finite garbage and are sliced off below.
        x2d = jnp.pad(x2d, ((0, rows_pad - rows), (0, 0)))

    b2d = b.astype(jnp.float32).reshape(1, D)
    g1 = (gamma.astype(jnp.float32) + 1.0).reshape(1, D)  # hoisted gamma + 1

    # TODO(synk): if a profile shows exposed DMA at small D, sweep
    # pipeline_mode=pl.Buffered(3) on the x / out BlockSpecs.
    if not use_ksplit:
        out2d = pl.pallas_call(
            _rn_kernel_resident,
            out_shape=jax.ShapeDtypeStruct((rows_pad, D), out_dtype),
            grid_spec=pltpu.PrefetchScalarGridSpec(
                num_scalar_prefetch=0,
                grid=(rows_pad // tm_eff,),
                in_specs=[
                    pl.BlockSpec((tm_eff, D), lambda i: (i, 0)),          # x rows
                    _maybe_single_buffered_spec((D, D), lambda i: (0, 0),
                                                single_buffer_w),         # weight
                    pl.BlockSpec((1, D), lambda i: (0, 0)),               # bias
                    pl.BlockSpec((1, D), lambda i: (0, 0)),               # gamma + 1
                ],
                out_specs=pl.BlockSpec((tm_eff, D), lambda i: (i, 0)),
            ),
            compiler_params=pltpu.CompilerParams(
                dimension_semantics=("parallel",),
                vmem_limit_bytes=vmem_bytes,
            ),
        )(x2d, w, b2d, g1)
    else:
        out2d = pl.pallas_call(
            functools.partial(_rn_kernel_ksplit, tk=tk),
            out_shape=jax.ShapeDtypeStruct((rows_pad, D), out_dtype),
            grid_spec=pltpu.PrefetchScalarGridSpec(
                num_scalar_prefetch=0,
                grid=(rows_pad // tm_eff, D // tk),
                in_specs=[
                    pl.BlockSpec((tm_eff, D), lambda i, k: (i, 0)),       # x rows (resident over k)
                    pl.BlockSpec((tk, D), lambda i, k: (k, 0)),           # weight slab (streamed)
                    pl.BlockSpec((1, D), lambda i, k: (0, 0)),            # bias
                    pl.BlockSpec((1, D), lambda i, k: (0, 0)),            # gamma + 1
                ],
                out_specs=pl.BlockSpec((tm_eff, D), lambda i, k: (i, 0)),
                scratch_shapes=[pltpu.VMEM((tm_eff, D), jnp.float32)],    # f32 accumulator
            ),
            compiler_params=pltpu.CompilerParams(
                dimension_semantics=("parallel", "arbitrary"),
                vmem_limit_bytes=vmem_bytes,
            ),
        )(x2d, w, b2d, g1)

    return out2d[:rows].reshape(B, S, D)


# ----------------------------------------------------------------------------
# Reference + self-test
# ----------------------------------------------------------------------------
def _reference(x, w, b, gamma):
    # Mirror the kernel's MXU feed: activations rounded to the weight dtype,
    # products accumulated in f32.
    xw = x.astype(w.dtype).astype(jnp.float32)
    wf = w.astype(jnp.float32)
    y = jnp.einsum("bsd,de->bse", xw, wf) + b.astype(jnp.float32)
    mean = jnp.mean(y, axis=-1, keepdims=True)
    var = jnp.mean((y - mean) ** 2, axis=-1, keepdims=True)
    yn = (y - mean) * lax.rsqrt(var + EPS)
    return yn * (gamma.astype(jnp.float32) + 1.0) + x.astype(jnp.float32)


if __name__ == "__main__":
    def make_case(key, B, S, D):
        kx, kw, kb, kg = jax.random.split(key, 4)
        x = jax.random.normal(kx, (B, S, D), dtype=jnp.float32)
        # Deterministic synthetic parameters (shapes per module __init__):
        #   inner model = nn.Linear(dim, dim): weight (D, D), bias (D,)
        #   LayerNorm.gamma: (D,) (zeros at init; nonzero here to test the path)
        w_linear = jax.random.normal(kw, (D, D), dtype=jnp.float32) * (1.0 / jnp.sqrt(D))
        w_t = w_linear.T.astype(jnp.bfloat16)  # kernel computes x @ W.T, bf16 MXU feed
        b_linear = jax.random.normal(kb, (D,), dtype=jnp.float32) * 0.01
        gamma = jax.random.normal(kg, (D,), dtype=jnp.float32) * 0.1
        return x, w_t, b_linear, gamma

    key = jax.random.PRNGKey(0)
    k1, k2, k3 = jax.random.split(key, 3)

    # 1) Small case, resident-weight path, auto tile.
    x, w, b, g = make_case(k1, 2, 8, 128)
    out = jax.block_until_ready(residual_norm(x, w, b, g))
    ref = _reference(x, w, b, g)
    assert out.shape == x.shape
    assert jnp.allclose(out, ref, atol=2e-3, rtol=2e-3), "mismatch (resident, small)"

    # 2) Multi-tile resident path with row padding (rows=300, tm=128 -> grid=(3,)).
    x, w, b, g = make_case(k2, 3, 100, 128)
    out = jax.block_until_ready(residual_norm(x, w, b, g, tm=128))
    ref = _reference(x, w, b, g)
    assert jnp.allclose(out, ref, atol=2e-3, rtol=2e-3), "mismatch (resident, padded)"

    # 3) K-split streamed-weight path, forced at a small shape (D=256, tk=128 -> 2 k steps).
    x, w, b, g = make_case(k3, 2, 8, 256)
    out = jax.block_until_ready(residual_norm(x, w, b, g, force_ksplit=True))
    ref = _reference(x, w, b, g)
    assert jnp.allclose(out, ref, atol=2e-3, rtol=2e-3), "mismatch (k-split)"

    print("KERNEL_OK")
</pallas_src>

<mosaic_0001>
module attributes {stable_mosaic.version = 11 : i64} {
  func.func @_rn_kernel_resident(%arg0: i32, %arg1: memref<16x128xf32, #tpu.memory_space<vmem>>, %arg2: memref<128x128xbf16, #tpu.memory_space<vmem>>, %arg3: memref<1x128xf32, #tpu.memory_space<vmem>>, %arg4: memref<1x128xf32, #tpu.memory_space<vmem>>, %arg5: memref<16x128xf32, #tpu.memory_space<vmem>>) attributes {dimension_semantics = [#tpu.dimension_semantics<parallel>], iteration_bounds = array<i64: 1>, scalar_prefetch = 0 : i64, scratch_operands = 0 : i64, tpu.core_type = #tpu.core_type<tc>, window_params = [{transform_indices = @transform_0, window_bounds = array<i64: 16, 128>}, {pipeline_mode = #tpu.pipeline_mode<synchronous>, transform_indices = @transform_1, window_bounds = array<i64: 128, 128>}, {pipeline_mode = #tpu.pipeline_mode<synchronous>, transform_indices = @transform_2, window_bounds = array<i64: 1, 128>}, {pipeline_mode = #tpu.pipeline_mode<synchronous>, transform_indices = @transform_3, window_bounds = array<i64: 1, 128>}, {transform_indices = @transform_4, window_bounds = array<i64: 16, 128>}]} {
    %c0 = arith.constant 0 : index
    %c0_0 = arith.constant 0 : index
    %0 = vector.load %arg1[%c0, %c0_0] : memref<16x128xf32, #tpu.memory_space<vmem>>, vector<16x128xf32>
    %1 = arith.truncf %0 : vector<16x128xf32> to vector<16x128xbf16>
    %c0_1 = arith.constant 0 : index
    %c0_2 = arith.constant 0 : index
    %2 = vector.load %arg2[%c0_1, %c0_2] : memref<128x128xbf16, #tpu.memory_space<vmem>>, vector<128x128xbf16>
    %cst = arith.constant dense<0.000000e+00> : vector<16x128xf32>
    %3 = tpu.matmul %1, %2, %cst {dimension_numbers = #tpu.dot_dimension_numbers<[1], [0], [0], [1], [0, 0, 1, 1], [], []>} : vector<16x128xbf16>, vector<128x128xbf16>, vector<16x128xf32> -> vector<16x128xf32>
    %c0_3 = arith.constant 0 : index
    %c0_4 = arith.constant 0 : index
    %4 = vector.load %arg3[%c0_3, %c0_4] : memref<1x128xf32, #tpu.memory_space<vmem>>, vector<1x128xf32>
    %5 = vector.broadcast %4 : vector<1x128xf32> to vector<16x128xf32>
    %6 = arith.addf %3, %5 : vector<16x128xf32>
    %c0_5 = arith.constant 0 : index
    %c0_6 = arith.constant 0 : index
    %7 = vector.load %arg4[%c0_5, %c0_6] : memref<1x128xf32, #tpu.memory_space<vmem>>, vector<1x128xf32>
    %cst_7 = arith.constant dense<0.000000e+00> : vector<16xf32>
    %8 = vector.multi_reduction <add>, %6, %cst_7 [1] : vector<16x128xf32> to vector<16xf32>
    %9 = vector.shape_cast %8 : vector<16xf32> to vector<16x1xf32>
    %cst_8 = arith.constant 1.280000e+02 : f32
    %10 = vector.broadcast %cst_8 : f32 to vector<16x1xf32>
    %11 = arith.divf %9, %10 : vector<16x1xf32>
    %12 = vector.broadcast %11 : vector<16x1xf32> to vector<16x128xf32>
    %13 = arith.subf %6, %12 : vector<16x128xf32>
    %14 = arith.mulf %13, %13 : vector<16x128xf32>
    %cst_9 = arith.constant dense<0.000000e+00> : vector<16xf32>
    %15 = vector.multi_reduction <add>, %14, %cst_9 [1] : vector<16x128xf32> to vector<16xf32>
    %16 = vector.shape_cast %15 : vector<16xf32> to vector<16x1xf32>
    %cst_10 = arith.constant 1.280000e+02 : f32
    %17 = vector.broadcast %cst_10 : f32 to vector<16x1xf32>
    %18 = arith.divf %16, %17 : vector<16x1xf32>
    %cst_11 = arith.constant 9.99999974E-6 : f32
    %19 = vector.broadcast %cst_11 : f32 to vector<16x1xf32>
    %20 = arith.addf %18, %19 : vector<16x1xf32>
    %21 = math.rsqrt %20 : vector<16x1xf32>
    %22 = vector.broadcast %21 : vector<16x1xf32> to vector<16x128xf32>
    %23 = arith.mulf %13, %22 : vector<16x128xf32>
    %24 = vector.broadcast %7 : vector<1x128xf32> to vector<16x128xf32>
    %25 = arith.mulf %23, %24 : vector<16x128xf32>
    %26 = arith.addf %25, %0 : vector<16x128xf32>
    %c0_12 = arith.constant 0 : index
    %c0_13 = arith.constant 0 : index
    %27 = vector.load %arg5[%c0_12, %c0_13] : memref<16x128xf32, #tpu.memory_space<vmem>>, vector<16x128xf32>
    tpu.vector_store %arg5[%c0_12, %c0_13], %26 {strides = array<i32>} : memref<16x128xf32, #tpu.memory_space<vmem>>, vector<16x128xf32>,
    return
  }
  func.func @transform_0(%arg0: i32) -> (i32, i32) {
    %c0_i32 = arith.constant 0 : i32
    %c0_i32_0 = arith.constant 0 : i32
    return %arg0, %c0_i32 : i32, i32
  }
  func.func @transform_1(%arg0: i32) -> (i32, i32) {
    %c0_i32 = arith.constant 0 : i32
    %c0_i32_0 = arith.constant 0 : i32
    %c0_i32_1 = arith.constant 0 : i32
    return %c0_i32, %c0_i32_0 : i32, i32
  }
  func.func @transform_2(%arg0: i32) -> (i32, i32) {
    %c0_i32 = arith.constant 0 : i32
    %c0_i32_0 = arith.constant 0 : i32
    %c0_i32_1 = arith.constant 0 : i32
    return %c0_i32, %c0_i32_0 : i32, i32
  }
  func.func @transform_3(%arg0: i32) -> (i32, i32) {
    %c0_i32 = arith.constant 0 : i32
    %c0_i32_0 = arith.constant 0 : i32
    %c0_i32_1 = arith.constant 0 : i32
    return %c0_i32, %c0_i32_0 : i32, i32
  }
  func.func @transform_4(%arg0: i32) -> (i32, i32) {
    %c0_i32 = arith.constant 0 : i32
    %c0_i32_0 = arith.constant 0 : i32
    return %arg0, %c0_i32 : i32, i32
  }
}

</mosaic_0001>

<llo_original>
// kernel: residual_norm.1
$region0: #{residual_norm.1}
  #allocation0 [shape = 'u32[]', space=smem, size = 0x4, offset = 0x4, fixed_abs, tag = 'smem constant byte address 0x4 - core index']
  #allocation1 [shape = 'u32[72,128]{1,0:T(1,128)}', space=vmem, size = 0x9000, scoped, tag = 'internal scratch']
  %s0 = inlined_call_operand.hbm [shape: f32[16,128], index: 0, kind: input, shape index: {}]
  %s1 = inlined_call_operand.hbm [shape: bf16[128,128], index: 1, kind: input, shape index: {}]
  %s2 = inlined_call_operand.vmem [shape: f32[1,128], index: 2, kind: input, shape index: {}]
  %s3 = inlined_call_operand.vmem [shape: f32[1,128], index: 3, kind: input, shape index: {}]
  %s4 = inlined_call_operand.hbm [shape: f32[16,128], index: 4, kind: output, shape index: {}]
  %s5 = sld [smem:[#allocation0]]
  $region34: #{residual_norm.1} parent=0
    _
  %s7 = ssub.s32 1, %s5
  %s8 = scalar_select 0, %s7, %s5
  $region1: #{residual_norm.1} parent=0
    #allocation2 [shape = 'u8[8192]{0}', space=vmem, size = 0x2000, scoped, tag = 'input window, operand 0, single buffered']
    #allocation3 [shape = 's32[1]{0}', space=sflag, size = 0x4, scoped, tag = 'scoped memory for residual_norm.1']
    #allocation4 [shape = 's32[1]{0}', space=sflag, size = 0x4, scoped, tag = 'scoped memory for residual_norm.1']
    #allocation5 [shape = 'u8[32768]{0}', space=vmem, size = 0x8000, scoped, tag = 'input window, operand 1, single buffered']
    #allocation6 [shape = 's32[1]{0}', space=sflag, size = 0x4, scoped, tag = 'scoped memory for residual_norm.1']
    #allocation7 [shape = 'u8[8192]{0}', space=vmem, size = 0x2000, scoped, tag = 'output window, operand 0, single buffered']
    %9 = vsyncpa [#allocation3], 0
    %10 = vsyncpa [#allocation6], 0
    %11 = vsyncpa [#allocation4], 0
    // Predicated region
    $region2: #{residual_norm.1} parent=1 // pred_check
      _
    $region3: #{residual_norm.1} parent=1 // pred_check_branch
      %13 = sbr.rel (0) target = $region5
    $region4: #{residual_norm.1} parent=1 // pred_region
      %15 = vsyncadd [#allocation3], 0
      %s16 = sshll.u32 %s0, 4
      %s17 = int_to_ptr.hbm [resolvable:$true] %s16
      %s18 = sshll.u32 [#allocation2], 4
      %s19 = int_to_ptr.vmem [resolvable:$true] %s18
      %24 = dma.hbm_to_vmem [thread:$0]  %s17, 256, %s19, [#allocation3], 128, 128, 8
    $region5: #{residual_norm.1} parent=1 // pred_fallthru
      _
    // Predicated region
    $region6: #{residual_norm.1} parent=1 // pred_check
      _
    $region7: #{residual_norm.1} parent=1 // pred_check_branch
      %26 = sbr.rel (0) target = $region9
    $region8: #{residual_norm.1} parent=1 // pred_region
      %28 = vsyncadd [#allocation6], 0
      %s29 = sshll.u32 %s1, 4
      %s30 = int_to_ptr.hbm [resolvable:$true] %s29
      %s31 = sshll.u32 [#allocation5], 4
      %s32 = int_to_ptr.vmem [resolvable:$true] %s31
      %37 = dma.hbm_to_vmem [thread:$0]  %s30, 1024, %s32, [#allocation6], 64, 64, 4
    $region9: #{residual_norm.1} parent=1 // pred_fallthru
      _
    // Predicated region
    $region10: #{residual_norm.1} parent=1 // pred_check
      _
    $region11: #{residual_norm.1} parent=1 // pred_check_branch
      %39 = sbr.rel (0) target = $region13
    $region12: #{residual_norm.1} parent=1 // pred_region
      _
    $region13: #{residual_norm.1} parent=1 // pred_fallthru
      _
    // Predicated region
    $region14: #{residual_norm.1} parent=1 // pred_check
      _
    $region15: #{residual_norm.1} parent=1 // pred_check_branch
      %41 = sbr.rel (0) target = $region17
    $region16: #{residual_norm.1} parent=1 // pred_region
      _
    $region17: #{residual_norm.1} parent=1 // pred_fallthru
      _
    // Predicated region
    $region18: #{residual_norm.1} parent=1 // pred_check
      _
    $region19: #{residual_norm.1} parent=1 // pred_check_branch
      %43 = sbr.rel (0) target = $region21
    $region20: #{residual_norm.1} parent=1 // pred_region
      %45 = dma.done [#allocation3], 256
    $region21: #{residual_norm.1} parent=1 // pred_fallthru
      _
    // Predicated region
    $region22: #{residual_norm.1} parent=1 // pred_check
      _
    $region23: #{residual_norm.1} parent=1 // pred_check_branch
      %47 = sbr.rel (0) target = $region25
    $region24: #{residual_norm.1} parent=1 // pred_region
      %49 = dma.done [#allocation6], 1024
    $region25: #{residual_norm.1} parent=1 // pred_fallthru
      _
    %v50 = vld [vmem:[#allocation2] sm:$0xff]
    %v51 = vld [vmem:[#allocation2 + $0x8] sm:$0xff]
    %v52 = vpack.c.bf16 %v51, %v50
    %v53 = vld [vmem:[#allocation5] sm:$0xf]
    %v54 = vld [vmem:[#allocation5 + $0x4] sm:$0xf]
    %v55 = vld [vmem:[#allocation5 + $0x8] sm:$0xf]
    %v56 = vld [vmem:[#allocation5 + $0xc] sm:$0xf]
    %v57 = vld [vmem:[#allocation5 + $0x10] sm:$0xf]
    %v58 = vld [vmem:[#allocation5 + $0x14] sm:$0xf]
    %v59 = vld [vmem:[#allocation5 + $0x18] sm:$0xf]
    %v60 = vld [vmem:[#allocation5 + $0x1c] sm:$0xf]
    %v61 = vld [vmem:[#allocation5 + $0x20] sm:$0xf]
    %v62 = vld [vmem:[#allocation5 + $0x24] sm:$0xf]
    %v63 = vld [vmem:[#allocation5 + $0x28] sm:$0xf]
    %v64 = vld [vmem:[#allocation5 + $0x2c] sm:$0xf]
    %v65 = vld [vmem:[#allocation5 + $0x30] sm:$0xf]
    %v66 = vld [vmem:[#allocation5 + $0x34] sm:$0xf]
    %v67 = vld [vmem:[#allocation5 + $0x38] sm:$0xf]
    %v68 = vld [vmem:[#allocation5 + $0x3c] sm:$0xf]
    %v69 = vld [vmem:[%s2] sm:$0x1]
    %v71 = vperm.slane %v69, 0
    %v89 = vunpack.c.l.b16 %v53
    %v90 = vunpack.c.l.b16 %v54
    %v91 = vunpack.c.l.b16 %v55
    %v92 = vunpack.c.l.b16 %v56
    %v93 = vunpack.c.l.b16 %v57
    %v94 = vunpack.c.l.b16 %v58
    %v95 = vunpack.c.l.b16 %v59
    %v96 = vunpack.c.l.b16 %v60
    %v97 = vunpack.c.l.b16 %v61
    %v98 = vunpack.c.l.b16 %v62
    %v99 = vunpack.c.l.b16 %v63
    %v100 = vunpack.c.l.b16 %v64
    %v101 = vunpack.c.l.b16 %v65
    %v102 = vunpack.c.l.b16 %v66
    %v103 = vunpack.c.l.b16 %v67
    %v104 = vunpack.c.l.b16 %v68
    %v105 = vpack.c.b16 %v90, %v89
    %v106 = vpack.c.b16 %v92, %v91
    %v107 = vpack.c.b16 %v94, %v93
    %v108 = vpack.c.b16 %v96, %v95
    %v109 = vpack.c.b16 %v98, %v97
    %v110 = vpack.c.b16 %v100, %v99
    %v111 = vpack.c.b16 %v102, %v101
    %v112 = vpack.c.b16 %v104, %v103
    %121 = vmatpush.bf16.msra.mxu0 %v112
    %122 = vmatpush.bf16.msra.mxu0 %v111
    %123 = vmatpush.bf16.msra.mxu0 %v110
    %124 = vmatpush.bf16.msra.mxu0 %v109
    %125 = vmatpush.bf16.msra.mxu0 %v108
    %126 = vmatpush.bf16.msra.mxu0 %v107
    %127 = vmatpush.bf16.msra.mxu0 %v106
    %128 = vmatpush.bf16.msra.mxu0 %v105
    %129 = vmatmul.bf16.gmra.mxu0 %v52
    %v130 = vpop.f32.mrf.mxu0
    %v131 = vadd.f32 %v71, %v130
    %v132 = vpop.f32.mrf.mxu0
    %v133 = vadd.f32 %v71, %v132
    %134 = vdwg.mxu0
    %v135 = vld [vmem:[%s3] sm:$0x1]
    %136 = vadd.xlane.f32.xlu0 %v131
    %v137 = vpop.xlane.xlu0 %136
    %138 = vadd.xlane.f32.xlu0 %v133
    %v139 = vpop.xlane.xlu0 %138
    %v140 = vrcp.pop 128.0
    %v141 = vmul.f32 128.0, %v140
    %v142 = vsub.f32 1.0, %v141
    %v143 = vmul.f32 %v140, %v142
    %v144 = vadd.f32 %v140, %v143
    %vm145 = vweird.f32 %v140
    %v146 = vsel %vm145, %v140, %v144
    %v147 = vmul.f32 %v137, %v146
    %v148 = vmul.f32 %v139, %v146
    %v149 = vsub.f32 %v131, %v147
    %v150 = vsub.f32 %v133, %v148
    %v151 = vmul.f32 %v149, %v149
    %v152 = vmul.f32 %v150, %v150
    %153 = vadd.xlane.f32.xlu0 %v151
    %v154 = vpop.xlane.xlu0 %153
    %155 = vadd.xlane.f32.xlu0 %v152
    %v156 = vpop.xlane.xlu0 %155
    %v157 = vmul.f32 %v154, %v146
    %v158 = vmul.f32 %v156, %v146
    %v159 = vadd.f32 %v157, 1e-05
    %v160 = vadd.f32 %v158, 1e-05
    %v161 = vrsqrt.pop %v159
    %v162 = vmul.f32 %v161, %v159
    %v163 = vmul.f32 %v162, %v161
    %v164 = vmul.f32 0.5, %v163
    %v165 = vsub.f32 1.5, %v164
    %v166 = vmul.f32 %v161, %v165
    %vm167 = vweird.f32 %v159
    %vm168 = vweird.f32 %v161
    %vm169 = vmor %vm167, %vm168
    %v170 = vsel %vm169, %v161, %v166
    %v171 = vrsqrt.pop %v160
    %v172 = vmul.f32 %v171, %v160
    %v173 = vmul.f32 %v172, %v171
    %v174 = vmul.f32 0.5, %v173
    %v175 = vsub.f32 1.5, %v174
    %v176 = vmul.f32 %v171, %v175
    %vm177 = vweird.f32 %v160
    %vm178 = vweird.f32 %v171
    %vm179 = vmor %vm177, %vm178
    %v180 = vsel %vm179, %v171, %v176
    %v181 = vmul.f32 %v149, %v170
    %v182 = vmul.f32 %v150, %v180
    %v184 = vperm.slane %v135, 0
    %v186 = vmul.f32 %v181, %v184
    %v187 = vmul.f32 %v182, %v184
    %v188 = vadd.f32 %v186, %v50
    %v189 = vadd.f32 %v187, %v51
    %190 = vst [vmem:[#allocation7] sm:$0xff] %v188
    %191 = vst [vmem:[#allocation7 + $0x8] sm:$0xff] %v189
    // Predicated region
    $region26: #{residual_norm.1} parent=1 // pred_check
      _
    $region27: #{residual_norm.1} parent=1 // pred_check_branch
      %193 = sbr.rel (0) target = $region29
    $region28: #{residual_norm.1} parent=1 // pred_region
      %195 = vsyncadd [#allocation4], 0
      %s196 = sshll.u32 [#allocation7], 4
      %s197 = int_to_ptr.vmem [resolvable:$true] %s196
      %s198 = sshll.u32 %s4, 4
      %s199 = int_to_ptr.hbm [resolvable:$true] %s198
      %204 = dma.vmem_to_hbm [thread:$0]  %s197, 256, %s199, [#allocation4], 128, 128, 8
    $region29: #{residual_norm.1} parent=1 // pred_fallthru
      _
    // Predicated region
    $region30: #{residual_norm.1} parent=1 // pred_check
      _
    $region31: #{residual_norm.1} parent=1 // pred_check_branch
      %206 = sbr.rel (0) target = $region33
    $region32: #{residual_norm.1} parent=1 // pred_region
      %208 = dma.done [#allocation4], 256
    $region33: #{residual_norm.1} parent=1 // pred_fallthru
      _
    %209 = vsyncpa [#allocation3], 1
    %210 = vsyncpa [#allocation6], 1
    %211 = vsyncpa [#allocation4], 1

</llo_original>
